<compile_context>
chip_gen: v6e
topology: v6e:2x2x1
jax: 0.10.0
libtpu: 0.0.40
codegen_flags: <defaults>
</compile_context>

<pallas_src>
import numpy as np

import jax
import jax.numpy as jnp
from jax.experimental import pallas as pl
from jax.experimental.pallas import tpu as pltpu


_PI = 3.141592653589793
_PPI = 3.1415926235897933  # (sic) reproduce the reference's pRotatE constant exactly


def _round_up(x, m):
    return ((x + m - 1) // m) * m


def _pad_axis(x, target, axis):
    cur = x.shape[axis]
    if cur == target:
        return x
    pw = [(0, 0)] * x.ndim
    pw[axis] = (0, target - cur)
    return jnp.pad(x, pw)  # pads with index 0 -> a valid embedding row (result is sliced off)


def _step_vmem_bytes(tb, tn, entity_dim, relation_dim, itemsize=4):
    # Exact float count of all kernel input blocks + output block for one grid step:
    # one negative-side entity block, one broadcast entity block, one relation block, scores.
    floats = tb * tn * entity_dim + tb * entity_dim + tb * relation_dim + tb * tn
    return itemsize * floats


def _choose_tiles(batch, n_out, entity_dim, relation_dim,
                  max_double_buffered_bytes=16 * 1024 * 1024):
    """Pick (TB, TN, B_pad, N_pad) so blocks are lane/sublane aligned and fit VMEM."""
    # Negatives tile: lane axis of the output -> multiple of 128 (or 1 in 'single' mode).
    if n_out == 1:
        tn_cands = [1]
    else:
        top = min(_round_up(n_out, 128), 512)
        tn_cands = sorted({top} | {t for t in (512, 256, 128) if t <= top}, reverse=True)
    # Batch tile: sublane axis of the output -> multiple of 8 (or the whole small batch).
    if batch < 8:
        tb_cands = [batch]
    else:
        rb = _round_up(batch, 8)
        tb_cands = sorted({t for t in (256, 128, 64, 32, 16, 8) if t <= rb}
                          | ({rb} if rb <= 256 else set()), reverse=True)

    chosen = None
    for tn in tn_cands:                 # prefer the lane-densest output tile first
        for tb in tb_cands:             # then the biggest batch tile that fits
            if 2 * _step_vmem_bytes(tb, tn, entity_dim, relation_dim) \
                    <= max_double_buffered_bytes:
                chosen = (tb, tn)
                break
        if chosen is not None:
            break
    if chosen is None:                  # pathological dims: fall back to the smallest tiles
        chosen = (tb_cands[-1], tn_cands[-1])

    tb, tn = chosen
    return tb, tn, _round_up(batch, tb), _round_up(n_out, tn)


def _make_kernel(model_name, mode, gamma, embedding_range, modulus):
    gamma = float(gamma)
    rot_scale = _PI / float(embedding_range)     # RotatE:  1 / (embedding_range / pi)
    prot_scale = _PPI / float(embedding_range)   # pRotatE: 1 / (embedding_range / ppi)
    head_batch = (mode == 'head-batch')

    if model_name == 'TransE':
        def kernel(h_ref, r_ref, t_ref, o_ref):
            h = h_ref[...].astype(jnp.float32)
            r = r_ref[...].astype(jnp.float32)
            t = t_ref[...].astype(jnp.float32)
            s = h + (r - t) if head_batch else h + r - t
            o_ref[...] = (gamma - jnp.sum(jnp.abs(s), axis=2)).astype(o_ref.dtype)
        return kernel

    if model_name == 'DistMult':
        def kernel(h_ref, r_ref, t_ref, o_ref):
            h = h_ref[...].astype(jnp.float32)
            r = r_ref[...].astype(jnp.float32)
            t = t_ref[...].astype(jnp.float32)
            s = h * (r * t) if head_batch else h * r * t
            o_ref[...] = jnp.sum(s, axis=2).astype(o_ref.dtype)
        return kernel

    if model_name == 'ComplEx':
        def kernel(re_h_ref, im_h_ref, re_r_ref, im_r_ref, re_t_ref, im_t_ref, o_ref):
            re_h = re_h_ref[...].astype(jnp.float32)
            im_h = im_h_ref[...].astype(jnp.float32)
            re_r = re_r_ref[...].astype(jnp.float32)
            im_r = im_r_ref[...].astype(jnp.float32)
            re_t = re_t_ref[...].astype(jnp.float32)
            im_t = im_t_ref[...].astype(jnp.float32)
            if head_batch:
                re_s = re_r * re_t + im_r * im_t
                im_s = re_r * im_t - im_r * re_t
                s = re_h * re_s + im_h * im_s
            else:
                re_s = re_h * re_r - im_h * im_r
                im_s = re_h * im_r + im_h * re_r
                s = re_s * re_t + im_s * im_t
            o_ref[...] = jnp.sum(s, axis=2).astype(o_ref.dtype)
        return kernel

    if model_name == 'RotatE':
        def kernel(re_h_ref, im_h_ref, r_ref, re_t_ref, im_t_ref, o_ref):
            re_h = re_h_ref[...].astype(jnp.float32)
            im_h = im_h_ref[...].astype(jnp.float32)
            re_t = re_t_ref[...].astype(jnp.float32)
            im_t = im_t_ref[...].astype(jnp.float32)
            # cos/sin on the (TB, 1, D) relation block *before* it broadcasts across the
            # negatives axis keeps the single EUP slot off the hot path.
            phase = r_ref[...].astype(jnp.float32) * rot_scale
            re_r = jnp.cos(phase)
            im_r = jnp.sin(phase)
            if head_batch:
                re_s = re_r * re_t + im_r * im_t - re_h
                im_s = re_r * im_t - im_r * re_t - im_h
            else:
                re_s = re_h * re_r - im_h * im_r - re_t
                im_s = re_h * im_r + im_h * re_r - im_t
            s = jnp.sqrt(re_s * re_s + im_s * im_s)
            o_ref[...] = (gamma - jnp.sum(s, axis=2)).astype(o_ref.dtype)
        return kernel

    if model_name == 'pRotatE':
        def kernel(h_ref, r_ref, t_ref, o_ref):
            ph = h_ref[...].astype(jnp.float32) * prot_scale
            pr = r_ref[...].astype(jnp.float32) * prot_scale
            pt = t_ref[...].astype(jnp.float32) * prot_scale
            s = ph + (pr - pt) if head_batch else ph + pr - pt
            s = jnp.abs(jnp.sin(s))
            o_ref[...] = (gamma - jnp.sum(s, axis=2) * modulus).astype(o_ref.dtype)
        return kernel

    raise ValueError('model %s not supported' % model_name)


def kge_score_pallas(inputs, kernel, *, tb, tn, b_pad, n_pad,
                     vmem_limit_bytes=48 * 1024 * 1024):
    grid = (b_pad // tb, n_pad // tn)

    in_specs = []
    for arr in inputs:
        n_mid, d = arr.shape[1], arr.shape[2]
        if n_mid == 1:   # broadcast side (positive entity / relation)
            in_specs.append(pl.BlockSpec((tb, 1, d), lambda b, j: (b, 0, 0)))
        else:            # negative-entity side
            in_specs.append(pl.BlockSpec((tb, tn, d), lambda b, j: (b, j, 0)))
    out_spec = pl.BlockSpec((tb, tn), lambda b, j: (b, j))

    return pl.pallas_call(
        kernel,
        out_shape=jax.ShapeDtypeStruct((b_pad, n_pad), jnp.float32),
        grid_spec=pltpu.PrefetchScalarGridSpec(
            num_scalar_prefetch=0,
            grid=grid,
            in_specs=in_specs,
            out_specs=out_spec,
        ),
        compiler_params=pltpu.CompilerParams(
            dimension_semantics=("parallel", "parallel"),
            vmem_limit_bytes=vmem_limit_bytes),
    )(*inputs)


class KGEModelJax:
    """JAX/Pallas port of KGEModel's forward pass."""

    def __init__(self, model_name, nentity, nrelation, hidden_dim, gamma,
                 double_entity_embedding=False, double_relation_embedding=False,
                 key=None, param_dtype=jnp.float32):
        if model_name not in ['TransE', 'DistMult', 'ComplEx', 'RotatE', 'pRotatE']:
            raise ValueError('model %s not supported' % model_name)
        if model_name == 'RotatE' and (not double_entity_embedding or double_relation_embedding):
            raise ValueError('RotatE should use --double_entity_embedding')
        if model_name == 'ComplEx' and (not double_entity_embedding or not double_relation_embedding):
            raise ValueError('ComplEx should use double entity and relation embedding')

        self.model_name = model_name
        self.nentity = nentity
        self.nrelation = nrelation
        self.hidden_dim = hidden_dim
        self.epsilon = 2.0
        self.gamma = float(gamma)
        self.embedding_range = (self.gamma + self.epsilon) / hidden_dim
        self.entity_dim = hidden_dim * 2 if double_entity_embedding else hidden_dim
        self.relation_dim = hidden_dim * 2 if double_relation_embedding else hidden_dim

        if model_name in ('ComplEx', 'RotatE') and self.entity_dim % 2 != 0:
            raise ValueError('%s requires an even entity embedding dim' % model_name)
        if model_name == 'ComplEx' and self.relation_dim % 2 != 0:
            raise ValueError('ComplEx requires an even relation embedding dim')

        if key is None:
            key = jax.random.PRNGKey(0)
        k1, k2 = jax.random.split(key)
        self.entity_embedding = jax.random.uniform(
            k1, (nentity, self.entity_dim), dtype=jnp.float32,
            minval=-self.embedding_range, maxval=self.embedding_range).astype(param_dtype)
        self.relation_embedding = jax.random.uniform(
            k2, (nrelation, self.relation_dim), dtype=jnp.float32,
            minval=-self.embedding_range, maxval=self.embedding_range).astype(param_dtype)
        self.modulus = 0.5 * self.embedding_range if model_name == 'pRotatE' else None

    # ---------------- gather (index_select) — stays in XLA as glue ----------------
    def _gather(self, sample, mode, b_pad=None, n_pad=None):
        ent, rel = self.entity_embedding, self.relation_embedding
        if mode == 'single':
            s = sample if b_pad is None else _pad_axis(sample, b_pad, 0)
            head = jnp.take(ent, s[:, 0], axis=0)[:, None, :]
            relation = jnp.take(rel, s[:, 1], axis=0)[:, None, :]
            tail = jnp.take(ent, s[:, 2], axis=0)[:, None, :]
        elif mode == 'head-batch':
            tail_part, head_part = sample
            if b_pad is not None:
                tail_part = _pad_axis(tail_part, b_pad, 0)
                head_part = _pad_axis(_pad_axis(head_part, b_pad, 0), n_pad, 1)
            bsz, nneg = head_part.shape
            head = jnp.take(ent, head_part.reshape(-1), axis=0).reshape(bsz, nneg, -1)
            relation = jnp.take(rel, tail_part[:, 1], axis=0)[:, None, :]
            tail = jnp.take(ent, tail_part[:, 2], axis=0)[:, None, :]
        elif mode == 'tail-batch':
            head_part, tail_part = sample
            if b_pad is not None:
                head_part = _pad_axis(head_part, b_pad, 0)
                tail_part = _pad_axis(_pad_axis(tail_part, b_pad, 0), n_pad, 1)
            bsz, nneg = tail_part.shape
            head = jnp.take(ent, head_part[:, 0], axis=0)[:, None, :]
            relation = jnp.take(rel, head_part[:, 1], axis=0)[:, None, :]
            tail = jnp.take(ent, tail_part.reshape(-1), axis=0).reshape(bsz, nneg, -1)
        else:
            raise ValueError('mode %s not supported' % mode)
        return head, relation, tail

    # Wrapper-side re/im splitting (layout plumbing, keeps lane slicing out of the kernel).
    def _split_inputs(self, head, relation, tail):
        name = self.model_name
        if name in ('TransE', 'DistMult', 'pRotatE'):
            return [head, relation, tail]
        if name == 'ComplEx':
            re_h, im_h = jnp.split(head, 2, axis=2)
            re_r, im_r = jnp.split(relation, 2, axis=2)
            re_t, im_t = jnp.split(tail, 2, axis=2)
            return [re_h, im_h, re_r, im_r, re_t, im_t]
        if name == 'RotatE':
            re_h, im_h = jnp.split(head, 2, axis=2)
            re_t, im_t = jnp.split(tail, 2, axis=2)
            return [re_h, im_h, relation, re_t, im_t]
        raise ValueError(name)

    def __call__(self, sample, mode='single'):
        if mode == 'single':
            batch, n_out = int(sample.shape[0]), 1
        elif mode in ('head-batch', 'tail-batch'):
            batch, n_out = int(sample[1].shape[0]), int(sample[1].shape[1])
        else:
            raise ValueError('mode %s not supported' % mode)

        tb, tn, b_pad, n_pad = _choose_tiles(batch, n_out, self.entity_dim, self.relation_dim)
        head, relation, tail = self._gather(sample, mode, b_pad=b_pad, n_pad=n_pad)
        inputs = self._split_inputs(head, relation, tail)
        kernel = _make_kernel(self.model_name, mode, self.gamma,
                              self.embedding_range, self.modulus)
        score = kge_score_pallas(inputs, kernel, tb=tb, tn=tn, b_pad=b_pad, n_pad=n_pad)
        return score[:batch, :n_out]

    # -------- pure-JAX reference (mirrors the PyTorch math) for verification --------
    def reference(self, sample, mode='single'):
        head, relation, tail = self._gather(sample, mode)
        h = head.astype(jnp.float32)
        r = relation.astype(jnp.float32)
        t = tail.astype(jnp.float32)
        name = self.model_name
        if name == 'TransE':
            s = h + (r - t) if mode == 'head-batch' else h + r - t
            return self.gamma - jnp.sum(jnp.abs(s), axis=2)
        if name == 'DistMult':
            s = h * (r * t) if mode == 'head-batch' else h * r * t
            return jnp.sum(s, axis=2)
        if name == 'ComplEx':
            re_h, im_h = jnp.split(h, 2, axis=2)
            re_r, im_r = jnp.split(r, 2, axis=2)
            re_t, im_t = jnp.split(t, 2, axis=2)
            if mode == 'head-batch':
                re_s = re_r * re_t + im_r * im_t
                im_s = re_r * im_t - im_r * re_t
                s = re_h * re_s + im_h * im_s
            else:
                re_s = re_h * re_r - im_h * im_r
                im_s = re_h * im_r + im_h * re_r
                s = re_s * re_t + im_s * im_t
            return jnp.sum(s, axis=2)
        if name == 'RotatE':
            re_h, im_h = jnp.split(h, 2, axis=2)
            re_t, im_t = jnp.split(t, 2, axis=2)
            phase = r / (self.embedding_range / _PI)
            re_r, im_r = jnp.cos(phase), jnp.sin(phase)
            if mode == 'head-batch':
                re_s = re_r * re_t + im_r * im_t - re_h
                im_s = re_r * im_t - im_r * re_t - im_h
            else:
                re_s = re_h * re_r - im_h * im_r - re_t
                im_s = re_h * im_r + im_h * re_r - im_t
            return self.gamma - jnp.sum(jnp.sqrt(re_s * re_s + im_s * im_s), axis=2)
        if name == 'pRotatE':
            ph = h / (self.embedding_range / _PPI)
            pr = r / (self.embedding_range / _PPI)
            pt = t / (self.embedding_range / _PPI)
            s = ph + (pr - pt) if mode == 'head-batch' else ph + pr - pt
            return self.gamma - jnp.sum(jnp.abs(jnp.sin(s)), axis=2) * self.modulus
        raise ValueError(name)


if __name__ == "__main__":
    nentity, nrelation, hidden_dim, gamma = 64, 16, 32, 12.0

    configs = [
        ('TransE',   False, False),
        ('DistMult', False, False),
        ('ComplEx',  True,  True),
        ('RotatE',   True,  False),
        ('pRotatE',  False, False),
    ]

    def make_samples(k, batch, nneg):
        k1, k2, k3, k4 = jax.random.split(k, 4)
        pos = jnp.stack([
            jax.random.randint(k1, (batch,), 0, nentity),
            jax.random.randint(k2, (batch,), 0, nrelation),
            jax.random.randint(k3, (batch,), 0, nentity),
        ], axis=-1).astype(jnp.int32)
        neg = jax.random.randint(k4, (batch, nneg), 0, nentity).astype(jnp.int32)
        return pos, neg

    last = None

    # Small batch (< 8): whole-batch tiles, all models x all modes.
    pos_s, neg_s = make_samples(jax.random.PRNGKey(0), batch=2, nneg=8)
    modes_s = [('single', pos_s),
               ('head-batch', (pos_s, neg_s)),
               ('tail-batch', (pos_s, neg_s))]
    for i, (name, de, dr) in enumerate(configs):
        model = KGEModelJax(name, nentity, nrelation, hidden_dim, gamma,
                            double_entity_embedding=de, double_relation_embedding=dr,
                            key=jax.random.PRNGKey(100 + i))
        for mode, sample in modes_s:
            out = jax.block_until_ready(model(sample, mode=mode))
            ref = jax.block_until_ready(model.reference(sample, mode=mode))
            np.testing.assert_allclose(np.asarray(out), np.asarray(ref),
                                       rtol=1e-5, atol=1e-4)
            last = out

    # Larger batch (>= 8): 8-aligned batch tiles + batch/negative padding path.
    pos_l, neg_l = make_samples(jax.random.PRNGKey(1), batch=12, nneg=8)
    for i, (name, de, dr) in [(0, configs[0]), (3, configs[3])]:
        model = KGEModelJax(name, nentity, nrelation, hidden_dim, gamma,
                            double_entity_embedding=de, double_relation_embedding=dr,
                            key=jax.random.PRNGKey(200 + i))
        for mode, sample in [('single', pos_l), ('tail-batch', (pos_l, neg_l))]:
            out = jax.block_until_ready(model(sample, mode=mode))
            ref = jax.block_until_ready(model.reference(sample, mode=mode))
            np.testing.assert_allclose(np.asarray(out), np.asarray(ref),
                                       rtol=1e-5, atol=1e-4)
            last = out

    jax.block_until_ready(last)
    print("KERNEL_OK")
</pallas_src>

<mosaic_0001>
module attributes {stable_mosaic.version = 11 : i64} {
  func.func @kernel(%arg0: i32, %arg1: i32, %arg2: memref<2x1x32xf32, #tpu.memory_space<vmem>>, %arg3: memref<2x1x32xf32, #tpu.memory_space<vmem>>, %arg4: memref<2x1x32xf32, #tpu.memory_space<vmem>>, %arg5: memref<2x1xf32, #tpu.memory_space<vmem>>) attributes {dimension_semantics = [#tpu.dimension_semantics<parallel>, #tpu.dimension_semantics<parallel>], iteration_bounds = array<i64: 1, 1>, scalar_prefetch = 0 : i64, scratch_operands = 0 : i64, tpu.core_type = #tpu.core_type<tc>, window_params = [{transform_indices = @transform_0, window_bounds = array<i64: 2, 1, 32>}, {transform_indices = @transform_1, window_bounds = array<i64: 2, 1, 32>}, {transform_indices = @transform_2, window_bounds = array<i64: 2, 1, 32>}, {transform_indices = @transform_3, window_bounds = array<i64: 2, 1>}]} {
    %c0 = arith.constant 0 : index
    %c0_0 = arith.constant 0 : index
    %c0_1 = arith.constant 0 : index
    %0 = vector.load %arg2[%c0, %c0_0, %c0_1] : memref<2x1x32xf32, #tpu.memory_space<vmem>>, vector<2x1x32xf32>
    %c0_2 = arith.constant 0 : index
    %c0_3 = arith.constant 0 : index
    %c0_4 = arith.constant 0 : index
    %1 = vector.load %arg3[%c0_2, %c0_3, %c0_4] : memref<2x1x32xf32, #tpu.memory_space<vmem>>, vector<2x1x32xf32>
    %c0_5 = arith.constant 0 : index
    %c0_6 = arith.constant 0 : index
    %c0_7 = arith.constant 0 : index
    %2 = vector.load %arg4[%c0_5, %c0_6, %c0_7] : memref<2x1x32xf32, #tpu.memory_space<vmem>>, vector<2x1x32xf32>
    %3 = arith.addf %0, %1 : vector<2x1x32xf32>
    %4 = arith.subf %3, %2 : vector<2x1x32xf32>
    %5 = math.absf %4 : vector<2x1x32xf32>
    %cst = arith.constant dense<0.000000e+00> : vector<2x1xf32>
    %6 = vector.multi_reduction <add>, %5, %cst [2] : vector<2x1x32xf32> to vector<2x1xf32>
    %cst_8 = arith.constant 1.200000e+01 : f32
    %7 = vector.broadcast %cst_8 : f32 to vector<2x1xf32>
    %8 = arith.subf %7, %6 : vector<2x1xf32>
    %c0_9 = arith.constant 0 : index
    %c0_10 = arith.constant 0 : index
    %9 = vector.load %arg5[%c0_9, %c0_10] : memref<2x1xf32, #tpu.memory_space<vmem>>, vector<2x1xf32>
    tpu.vector_store %arg5[%c0_9, %c0_10], %8 {strides = array<i32>} : memref<2x1xf32, #tpu.memory_space<vmem>>, vector<2x1xf32>,
    return
  }
  func.func @transform_0(%arg0: i32, %arg1: i32) -> (i32, i32, i32) {
    %c0_i32 = arith.constant 0 : i32
    %c0_i32_0 = arith.constant 0 : i32
    %c0_i32_1 = arith.constant 0 : i32
    return %arg0, %c0_i32, %c0_i32_0 : i32, i32, i32
  }
  func.func @transform_1(%arg0: i32, %arg1: i32) -> (i32, i32, i32) {
    %c0_i32 = arith.constant 0 : i32
    %c0_i32_0 = arith.constant 0 : i32
    %c0_i32_1 = arith.constant 0 : i32
    return %arg0, %c0_i32, %c0_i32_0 : i32, i32, i32
  }
  func.func @transform_2(%arg0: i32, %arg1: i32) -> (i32, i32, i32) {
    %c0_i32 = arith.constant 0 : i32
    %c0_i32_0 = arith.constant 0 : i32
    %c0_i32_1 = arith.constant 0 : i32
    return %arg0, %c0_i32, %c0_i32_0 : i32, i32, i32
  }
  func.func @transform_3(%arg0: i32, %arg1: i32) -> (i32, i32) {
    %c0_i32 = arith.constant 0 : i32
    return %arg0, %arg1 : i32, i32
  }
}

</mosaic_0001>

<llo_original>
// kernel: tpu_custom_call.1
$region0: #{tpu_custom_call.1}
  #allocation0 [shape = 'u32[]', space=smem, size = 0x4, offset = 0x4, fixed_abs, tag = 'smem constant byte address 0x4 - core index']
  #allocation1 [shape = 'u32[144,128]{1,0:T(1,128)}', space=vmem, size = 0x12000, scoped, tag = 'internal scratch']
  %s0 = inlined_call_operand.hbm [shape: f32[2,1,32], index: 0, kind: input, shape index: {}]
  %s1 = inlined_call_operand.hbm [shape: f32[2,1,32], index: 1, kind: input, shape index: {}]
  %s2 = inlined_call_operand.vmem [shape: f32[2,1,32], index: 2, kind: input, shape index: {}]
  %s3 = inlined_call_operand.vmem [shape: f32[2,1], index: 3, kind: output, shape index: {}]
  %s4 = sld [smem:[#allocation0]]
  $region30: #{tpu_custom_call.1} parent=0
    _
  %s6 = ssub.s32 1, %s4
  %s7 = scalar_select 0, %s6, %s4
  $region1: #{tpu_custom_call.1} parent=0
    #allocation2 [shape = 'u8[1024]{0}', space=vmem, size = 0x400, scoped, tag = 'input window, operand 0, single buffered']
    #allocation3 [shape = 's32[1]{0}', space=sflag, size = 0x4, scoped, tag = 'scoped memory for tpu_custom_call.1']
    #allocation4 [shape = 'u8[1024]{0}', space=vmem, size = 0x400, scoped, tag = 'input window, operand 1, single buffered']
    #allocation5 [shape = 's32[1]{0}', space=sflag, size = 0x4, scoped, tag = 'scoped memory for tpu_custom_call.1']
    %8 = vsyncpa [#allocation3], 0
    %9 = vsyncpa [#allocation5], 0
    // Predicated region
    $region2: #{tpu_custom_call.1} parent=1 // pred_check
      _
    $region3: #{tpu_custom_call.1} parent=1 // pred_check_branch
      %11 = sbr.rel (0) target = $region5
    $region4: #{tpu_custom_call.1} parent=1 // pred_region
      %s13 = ssub.s32 32, 32
      %14 = vsyncadd [#allocation3], %s13
      %s15 = sshll.u32 [#allocation2], 4
      %s16 = int_to_ptr.vmem [resolvable:$true] %s15
      %21 = dma.hbm_to_vmem [thread:$0]  %s0, 32, %s16, [#allocation3], 16, 16, 1
    $region5: #{tpu_custom_call.1} parent=1 // pred_fallthru
      _
    // Predicated region
    $region6: #{tpu_custom_call.1} parent=1 // pred_check
      _
    $region7: #{tpu_custom_call.1} parent=1 // pred_check_branch
      %23 = sbr.rel (0) target = $region9
    $region8: #{tpu_custom_call.1} parent=1 // pred_region
      %s25 = ssub.s32 32, 32
      %26 = vsyncadd [#allocation5], %s25
      %s27 = sshll.u32 [#allocation4], 4
      %s28 = int_to_ptr.vmem [resolvable:$true] %s27
      %33 = dma.hbm_to_vmem [thread:$0]  %s1, 32, %s28, [#allocation5], 16, 16, 1
    $region9: #{tpu_custom_call.1} parent=1 // pred_fallthru
      _
    // Predicated region
    $region10: #{tpu_custom_call.1} parent=1 // pred_check
      _
    $region11: #{tpu_custom_call.1} parent=1 // pred_check_branch
      %35 = sbr.rel (0) target = $region13
    $region12: #{tpu_custom_call.1} parent=1 // pred_region
      _
    $region13: #{tpu_custom_call.1} parent=1 // pred_fallthru
      _
    // Predicated region
    $region14: #{tpu_custom_call.1} parent=1 // pred_check
      _
    $region15: #{tpu_custom_call.1} parent=1 // pred_check_branch
      %37 = sbr.rel (0) target = $region17
    $region16: #{tpu_custom_call.1} parent=1 // pred_region
      %38 = dma.done [#allocation3], 32
    $region17: #{tpu_custom_call.1} parent=1 // pred_fallthru
      _
    // Predicated region
    $region18: #{tpu_custom_call.1} parent=1 // pred_check
      _
    $region19: #{tpu_custom_call.1} parent=1 // pred_check_branch
      %40 = sbr.rel (0) target = $region21
    $region20: #{tpu_custom_call.1} parent=1 // pred_region
      %41 = dma.done [#allocation5], 32
    $region21: #{tpu_custom_call.1} parent=1 // pred_fallthru
      _
    %v42 = vld [vmem:[#allocation2] sm:$0x1]
    %v43 = vld [vmem:[#allocation2 + $0x1] sm:$0x1]
    %v44 = vld [vmem:[#allocation4] sm:$0x1]
    %v45 = vld [vmem:[#allocation4 + $0x1] sm:$0x1]
    %v46 = vld [vmem:[%s2] sm:$0x1]
    %v47 = vld [vmem:[%s2 + $0x1] sm:$0x1]
    %v48 = vadd.f32 %v42, %v44
    %v49 = vadd.f32 %v43, %v45
    %v50 = vsub.f32 %v48, %v46
    %v51 = vsub.f32 %v49, %v47
    %v52 = vand.u32 2147483647, %v50
    %v53 = vand.u32 2147483647, %v51
    %vm54 = vcmask 253952
    %v55 = vsel %vm54, %v52, 0.0
    %56 = vadd.xlane.f32.xlu0 %v55
    %v57 = vpop.xlane.xlu0 %56
    %v58 = vsel %vm54, %v53, 0.0
    %59 = vadd.xlane.f32.xlu0 %v58
    %v60 = vpop.xlane.xlu0 %59
    %v61 = vsub.f32 12.0, %v57
    %v62 = vsub.f32 12.0, %v60
    %v65 = vrot.slane %v62, 7
    %vm66 = vcmask 1041409
    %v67 = vsel %vm66, %v65, %v61
    %vm69 = vcmask 1024
    %70 = vst.msk [vmem:[%s3] sm:$0x3] %vm69, %v67
    // Predicated region
    $region22: #{tpu_custom_call.1} parent=1 // pred_check
      _
    $region23: #{tpu_custom_call.1} parent=1 // pred_check_branch
      %72 = sbr.rel (0) target = $region25
    $region24: #{tpu_custom_call.1} parent=1 // pred_region
      _
    $region25: #{tpu_custom_call.1} parent=1 // pred_fallthru
      _
    // Predicated region
    $region26: #{tpu_custom_call.1} parent=1 // pred_check
      _
    $region27: #{tpu_custom_call.1} parent=1 // pred_check_branch
      %74 = sbr.rel (0) target = $region29
    $region28: #{tpu_custom_call.1} parent=1 // pred_region
      _
    $region29: #{tpu_custom_call.1} parent=1 // pred_fallthru
      _
    %75 = vsyncpa [#allocation3], 1
    %76 = vsyncpa [#allocation5], 1

</llo_original>
